<compile_context>
chip_gen: v7x
topology: tpu7x:2x2x1
jax: 0.10.0
libtpu: 0.0.40
codegen_flags: <defaults>
</compile_context>

<pallas_src>
import jax
import jax.numpy as jnp
from jax.experimental import pallas as pl
from jax.experimental.pallas import tpu as pltpu


def _round_up(x, m):
    return ((x + m - 1) // m) * m


# ----------------------------- Pallas kernel ------------------------------ #
def _fine_preprocess_kernel(f_ref, c_ref, wbd_ref, w2t_ref, b2t_ref, o_ref):
    # f_ref  : [bm, ww*Cf]      flattened fine-window features (lane-dense)
    # c_ref  : [bm, Cc]         coarse features at the matched locations
    # wbd_ref: [ww*Cf, ww*Cf]   block-diagonal merge weight (fine half)
    # w2t_ref: [Cc, ww*Cf]      down_proj folded into merge (lane-tiled)
    # b2t_ref: [1, ww*Cf]       folded bias (lane-tiled)
    # o_ref  : [bm, ww*Cf]      merged output
    acc = jnp.dot(f_ref[...], wbd_ref[...], preferred_element_type=jnp.float32)
    acc = acc + jnp.dot(c_ref[...], w2t_ref[...],
                        preferred_element_type=jnp.float32)
    o_ref[...] = (acc + b2t_ref[...]).astype(o_ref.dtype)


# ------------------------------ JAX glue ---------------------------------- #
def _gather_matched_windows_flat(feat_nchw, b_ids, l_ids, W, stride):
    """Gather only the matched W x W unfold windows (padding=W//2) directly
    from the NCHW fine feature map and return them flattened channels-last:
    [M, W*W*C], flat index = (dy*W + dx)*C + c — identical ordering to
    rearrange(F.unfold(feat,(W,W),stride,W//2), 'n (c ww) l -> n l ww c')
    followed by a row-major reshape of the last two dims."""
    pad = W // 2
    N, C, H, Wf = feat_nchw.shape
    feat = jnp.transpose(feat_nchw, (0, 2, 3, 1))                 # NHWC
    fp = jnp.pad(feat, ((0, 0), (pad, pad), (pad, pad), (0, 0)))
    Wc = (Wf + 2 * pad - W) // stride + 1                         # coarse width
    hc = l_ids // Wc
    wc = l_ids % Wc
    rows = hc[:, None] * stride + jnp.arange(W)[None, :]          # [M, W]
    cols = wc[:, None] * stride + jnp.arange(W)[None, :]          # [M, W]
    g = fp[b_ids[:, None, None], rows[:, :, None], cols[:, None, :], :]
    #                                                 [M, W, W, C]
    return g.reshape(b_ids.shape[0], W * W * C)


def fine_preprocess(feat_f0, feat_f1, feat_c0, feat_c1,
                    b_ids, i_ids, j_ids, params, *, W, stride, block_m=1024):
    cf = params["down_w"].shape[0]        # d_model_f
    cc = params["down_w"].shape[1]        # d_model_c
    ww = W * W
    d = ww * cf
    M = b_ids.shape[0]
    dtype = feat_f0.dtype
    if M == 0:
        empty = jnp.zeros((0, ww, cf), dtype)
        return empty, empty

    # NOTE: XLA gather clamps out-of-range ids silently; callers must pass
    # valid b/i/j ids (matches the PyTorch contract).
    f0 = _gather_matched_windows_flat(feat_f0, b_ids, i_ids, W, stride)  # [M, d]
    f1 = _gather_matched_windows_flat(feat_f1, b_ids, j_ids, W, stride)  # [M, d]
    c0 = feat_c0[b_ids, i_ids]                                           # [M, Cc]
    c1 = feat_c1[b_ids, j_ids]

    # Fold down_proj into merge_feat and build lane-dense weights ONCE:
    #   merged = [f | down(c)] @ merge_w.T + merge_b
    #          = f @ Wf + c @ (down_w.T @ Wc) + (down_b @ Wc + merge_b)
    # Block-diagonal fine weight so the whole window is one contraction.
    wm_t = params["merge_w"].T.astype(jnp.float32)          # [2Cf, Cf]
    wf = wm_t[:cf]                                           # [Cf, Cf]
    wc_half = wm_t[cf:]                                      # [Cf, Cf]
    wbd = jnp.kron(jnp.eye(ww, dtype=jnp.float32), wf)       # [d, d]
    w2 = params["down_w"].T.astype(jnp.float32) @ wc_half    # [Cc, Cf]
    w2t = jnp.tile(w2, (1, ww))                               # [Cc, d]
    b2 = (params["down_b"].astype(jnp.float32) @ wc_half
          + params["merge_b"].astype(jnp.float32))
    b2t = jnp.tile(b2, ww).reshape(1, d)                      # [1, d] (f32)

    wbd = wbd.astype(dtype)
    w2t = w2t.astype(dtype)

    def run(f_flat, c_sel):
        rows = f_flat.shape[0]
        # Block choice: large lane-dense blocks (≈2 MiB each at bm=1024),
        # multiple of 8 so the BlockSpec is legal, >= 2 grid steps when there
        # is enough work (v7x has 2 TensorCores).  Partial tail block is
        # handled by Pallas: OOB output writes dropped, rows independent.
        bm = min(block_m, max(8, _round_up(pl.cdiv(rows, 2), 8)))
        grid = (pl.cdiv(rows, bm),)
        return pl.pallas_call(
            _fine_preprocess_kernel,
            out_shape=jax.ShapeDtypeStruct((rows, d), dtype),
            grid_spec=pltpu.PrefetchScalarGridSpec(
                num_scalar_prefetch=0,
                grid=grid,
                in_specs=[
                    pl.BlockSpec((bm, d), lambda i: (i, 0)),    # fine windows
                    pl.BlockSpec((bm, cc), lambda i: (i, 0)),   # coarse feats
                    pl.BlockSpec((d, d), lambda i: (0, 0)),     # block-diag Wf
                    pl.BlockSpec((cc, d), lambda i: (0, 0)),    # folded coarse W
                    pl.BlockSpec((1, d), lambda i: (0, 0)),     # folded bias
                ],
                out_specs=pl.BlockSpec((bm, d), lambda i: (i, 0)),
            ),
            compiler_params=pltpu.CompilerParams(
                dimension_semantics=("parallel",)),
        )(f_flat, c_sel, wbd, w2t, b2t)

    out0 = run(f0, c0).reshape(M, ww, cf)
    out1 = run(f1, c1).reshape(M, ww, cf)
    return out0, out1


# --------------------------- pure-JAX reference ---------------------------- #
def _unfold_windows(feat, W, stride):
    """Full F.unfold(feat,(W,W),stride,padding=W//2) -> [N, L, W*W, C]
    (reference / test only — the production path gathers matched windows)."""
    pad = W // 2
    N, C, H, Wf = feat.shape
    fp = jnp.pad(feat, ((0, 0), (0, 0), (pad, pad), (pad, pad)))
    Hc = (H + 2 * pad - W) // stride + 1
    Wc = (Wf + 2 * pad - W) // stride + 1
    rows = (jnp.arange(Hc) * stride)[:, None] + jnp.arange(W)[None, :]
    cols = (jnp.arange(Wc) * stride)[:, None] + jnp.arange(W)[None, :]
    g = fp[:, :, rows[:, :, None, None], cols[None, None, :, :]]   # [N,C,Hc,W,Wc,W]
    g = jnp.transpose(g, (0, 2, 4, 3, 5, 1))                       # [N,Hc,Wc,dy,dx,C]
    return g.reshape(N, Hc * Wc, W * W, C)


def _reference(feat_f0, feat_f1, feat_c0, feat_c1, b_ids, i_ids, j_ids,
               params, W, stride):
    f0 = _unfold_windows(feat_f0, W, stride)[b_ids, i_ids]
    f1 = _unfold_windows(feat_f1, W, stride)[b_ids, j_ids]
    c = jnp.concatenate([feat_c0[b_ids, i_ids], feat_c1[b_ids, j_ids]], 0)
    down = c @ params["down_w"].T + params["down_b"]
    f = jnp.concatenate([f0, f1], 0)
    ww = W * W
    cat = jnp.concatenate(
        [f, jnp.broadcast_to(down[:, None, :], (f.shape[0], ww, down.shape[-1]))], -1)
    merged = cat @ params["merge_w"].T + params["merge_b"]
    return jnp.split(merged, 2, axis=0)


# ----------------------------------- main ---------------------------------- #
if __name__ == "__main__":
    key = jax.random.PRNGKey(0)
    ks = jax.random.split(key, 10)

    # config: fine_concat_coarse_feat=True, fine_window_size=5,
    #         d_model_c=32, d_model_f=16
    W = 5
    d_model_c = 32
    d_model_f = 16
    N, C_f, H_f, W_f = 2, d_model_f, 16, 16
    H_c, W_c = 8, 8
    stride = H_f // H_c
    L = H_c * W_c
    M = 16  # number of coarse matches

    feat_f0 = jax.random.normal(ks[0], (N, C_f, H_f, W_f), jnp.float32)
    feat_f1 = jax.random.normal(ks[1], (N, C_f, H_f, W_f), jnp.float32)
    feat_c0 = jax.random.normal(ks[2], (N, L, d_model_c), jnp.float32)
    feat_c1 = jax.random.normal(ks[3], (N, L, d_model_c), jnp.float32)

    b_ids = jax.random.randint(ks[4], (M,), 0, N)
    i_ids = jax.random.randint(ks[5], (M,), 0, L)
    j_ids = jax.random.randint(ks[6], (M,), 0, L)

    # deterministic kaiming-normal-style init (fan_out, relu gain)
    params = {
        "down_w": jax.random.normal(ks[7], (d_model_f, d_model_c), jnp.float32)
                  * jnp.sqrt(2.0 / d_model_f),
        "down_b": 0.01 * jax.random.normal(ks[8], (d_model_f,), jnp.float32),
        "merge_w": jax.random.normal(ks[9], (d_model_f, 2 * d_model_f), jnp.float32)
                   * jnp.sqrt(2.0 / d_model_f),
        "merge_b": 0.01 * jax.random.normal(jax.random.PRNGKey(1),
                                            (d_model_f,), jnp.float32),
    }

    out0, out1 = fine_preprocess(feat_f0, feat_f1, feat_c0, feat_c1,
                                 b_ids, i_ids, j_ids, params,
                                 W=W, stride=stride)
    jax.block_until_ready((out0, out1))

    ref0, ref1 = _reference(feat_f0, feat_f1, feat_c0, feat_c1,
                            b_ids, i_ids, j_ids, params, W, stride)
    assert out0.shape == (M, W * W, d_model_f) and out1.shape == (M, W * W, d_model_f)
    assert jnp.allclose(out0, ref0, atol=1e-4, rtol=1e-4)
    assert jnp.allclose(out1, ref1, atol=1e-4, rtol=1e-4)

    print("KERNEL_OK")
</pallas_src>

<mosaic_0001>
module attributes {stable_mosaic.version = 11 : i64} {
  func.func @_fine_preprocess_kernel(%arg0: i32, %arg1: memref<8x400xf32, #tpu.memory_space<vmem>>, %arg2: memref<8x32xf32, #tpu.memory_space<vmem>>, %arg3: memref<400x400xf32, #tpu.memory_space<vmem>>, %arg4: memref<32x400xf32, #tpu.memory_space<vmem>>, %arg5: memref<1x400xf32, #tpu.memory_space<vmem>>, %arg6: memref<8x400xf32, #tpu.memory_space<vmem>>) attributes {dimension_semantics = [#tpu.dimension_semantics<parallel>], iteration_bounds = array<i64: 2>, scalar_prefetch = 0 : i64, scratch_operands = 0 : i64, tpu.core_type = #tpu.core_type<tc>, window_params = [{transform_indices = @transform_0, window_bounds = array<i64: 8, 400>}, {transform_indices = @transform_1, window_bounds = array<i64: 8, 32>}, {pipeline_mode = #tpu.pipeline_mode<synchronous>, transform_indices = @transform_2, window_bounds = array<i64: 400, 400>}, {pipeline_mode = #tpu.pipeline_mode<synchronous>, transform_indices = @transform_3, window_bounds = array<i64: 32, 400>}, {pipeline_mode = #tpu.pipeline_mode<synchronous>, transform_indices = @transform_4, window_bounds = array<i64: 1, 400>}, {transform_indices = @transform_5, window_bounds = array<i64: 8, 400>}]} {
    %c0 = arith.constant 0 : index
    %c0_0 = arith.constant 0 : index
    %0 = vector.load %arg1[%c0, %c0_0] : memref<8x400xf32, #tpu.memory_space<vmem>>, vector<8x400xf32>
    %c0_1 = arith.constant 0 : index
    %c0_2 = arith.constant 0 : index
    %1 = vector.load %arg3[%c0_1, %c0_2] : memref<400x400xf32, #tpu.memory_space<vmem>>, vector<400x400xf32>
    %cst = arith.constant dense<0.000000e+00> : vector<8x400xf32>
    %2 = tpu.matmul %0, %1, %cst {dimension_numbers = #tpu.dot_dimension_numbers<[1], [0], [0], [1], [0, 0, 1, 1], [], []>} : vector<8x400xf32>, vector<400x400xf32>, vector<8x400xf32> -> vector<8x400xf32>
    %c0_3 = arith.constant 0 : index
    %c0_4 = arith.constant 0 : index
    %3 = vector.load %arg2[%c0_3, %c0_4] : memref<8x32xf32, #tpu.memory_space<vmem>>, vector<8x32xf32>
    %c0_5 = arith.constant 0 : index
    %c0_6 = arith.constant 0 : index
    %4 = vector.load %arg4[%c0_5, %c0_6] : memref<32x400xf32, #tpu.memory_space<vmem>>, vector<32x400xf32>
    %cst_7 = arith.constant dense<0.000000e+00> : vector<8x400xf32>
    %5 = tpu.matmul %3, %4, %cst_7 {dimension_numbers = #tpu.dot_dimension_numbers<[1], [0], [0], [1], [0, 0, 1, 1], [], []>} : vector<8x32xf32>, vector<32x400xf32>, vector<8x400xf32> -> vector<8x400xf32>
    %6 = arith.addf %2, %5 : vector<8x400xf32>
    %c0_8 = arith.constant 0 : index
    %c0_9 = arith.constant 0 : index
    %7 = vector.load %arg5[%c0_8, %c0_9] : memref<1x400xf32, #tpu.memory_space<vmem>>, vector<1x400xf32>
    %8 = vector.broadcast %7 : vector<1x400xf32> to vector<8x400xf32>
    %9 = arith.addf %6, %8 : vector<8x400xf32>
    %c0_10 = arith.constant 0 : index
    %c0_11 = arith.constant 0 : index
    %10 = vector.load %arg6[%c0_10, %c0_11] : memref<8x400xf32, #tpu.memory_space<vmem>>, vector<8x400xf32>
    tpu.vector_store %arg6[%c0_10, %c0_11], %9 {strides = array<i32>} : memref<8x400xf32, #tpu.memory_space<vmem>>, vector<8x400xf32>,
    return
  }
  func.func @transform_0(%arg0: i32) -> (i32, i32) {
    %c0_i32 = arith.constant 0 : i32
    %c0_i32_0 = arith.constant 0 : i32
    return %arg0, %c0_i32 : i32, i32
  }
  func.func @transform_1(%arg0: i32) -> (i32, i32) {
    %c0_i32 = arith.constant 0 : i32
    %c0_i32_0 = arith.constant 0 : i32
    return %arg0, %c0_i32 : i32, i32
  }
  func.func @transform_2(%arg0: i32) -> (i32, i32) {
    %c0_i32 = arith.constant 0 : i32
    %c0_i32_0 = arith.constant 0 : i32
    %c0_i32_1 = arith.constant 0 : i32
    return %c0_i32, %c0_i32_0 : i32, i32
  }
  func.func @transform_3(%arg0: i32) -> (i32, i32) {
    %c0_i32 = arith.constant 0 : i32
    %c0_i32_0 = arith.constant 0 : i32
    %c0_i32_1 = arith.constant 0 : i32
    return %c0_i32, %c0_i32_0 : i32, i32
  }
  func.func @transform_4(%arg0: i32) -> (i32, i32) {
    %c0_i32 = arith.constant 0 : i32
    %c0_i32_0 = arith.constant 0 : i32
    %c0_i32_1 = arith.constant 0 : i32
    return %c0_i32, %c0_i32_0 : i32, i32
  }
  func.func @transform_5(%arg0: i32) -> (i32, i32) {
    %c0_i32 = arith.constant 0 : i32
    %c0_i32_0 = arith.constant 0 : i32
    return %arg0, %c0_i32 : i32, i32
  }
}

</mosaic_0001>

<llo_original>
// kernel: tpu_custom_call.1
$region0: #{tpu_custom_call.1}
  #allocation0 [shape = 'u32[]', space=smem, size = 0x4, offset = 0x4, fixed_abs, tag = 'smem constant byte address 0x4 - core index']
  #allocation1 [shape = 'u32[144,128]{1,0:T(1,128)}', space=vmem, size = 0x12000, scoped, tag = 'internal scratch']
  %s0 = inlined_call_operand.hbm [shape: f32[16,400], index: 0, kind: input, shape index: {}]
  %s1 = inlined_call_operand.hbm [shape: f32[16,32], index: 1, kind: input, shape index: {}]
  %s2 = inlined_call_operand.hbm [shape: f32[400,400], index: 2, kind: input, shape index: {}]
  %s3 = inlined_call_operand.hbm [shape: f32[32,400], index: 3, kind: input, shape index: {}]
  %s4 = inlined_call_operand.vmem [shape: f32[1,400], index: 4, kind: input, shape index: {}]
  %s5 = inlined_call_operand.hbm [shape: f32[16,400], index: 5, kind: output, shape index: {}]
  %s6 = sld [smem:[#allocation0]]
  $region69: #{tpu_custom_call.1} parent=0
    _
  %s8 = ssub.s32 1, %s6
  %s9 = scalar_select 0, %s8, %s6
  $region1: #{tpu_custom_call.1} parent=0
    #allocation2 [shape = 'u8[32768]{0}', space=vmem, size = 0x8000, scoped, tag = 'input window, operand 0']
    #allocation3 [shape = 's32[2]{0}', space=sflag, size = 0x8, scoped, tag = 'scoped memory for tpu_custom_call.1']
    #allocation4 [shape = 's32[2]{0}', space=sflag, size = 0x8, scoped, tag = 'scoped memory for tpu_custom_call.1']
    #allocation5 [shape = 'u8[8192]{0}', space=vmem, size = 0x2000, scoped, tag = 'input window, operand 1']
    #allocation6 [shape = 's32[2]{0}', space=sflag, size = 0x8, scoped, tag = 'scoped memory for tpu_custom_call.1']
    #allocation7 [shape = 'u8[819200]{0}', space=vmem, size = 0xc8000, scoped, tag = 'input window, operand 2, single buffered']
    #allocation8 [shape = 'u8[65536]{0}', space=vmem, size = 0x10000, scoped, tag = 'input window, operand 3, single buffered']
    #allocation9 [shape = 's32[1]{0}', space=sflag, size = 0x4, scoped, tag = 'scoped memory for tpu_custom_call.1']
    #allocation10 [shape = 'u8[32768]{0}', space=vmem, size = 0x8000, scoped, tag = 'output window, operand 0']
    %10 = vsyncpa [#allocation3], 0
    %s11 = scalar_lea.sflag [#allocation3], 1
    %12 = vsyncpa %s11, 0
    %13 = vsyncpa [#allocation6], 0
    %s14 = scalar_lea.sflag [#allocation6], 1
    %15 = vsyncpa %s14, 0
    %16 = vsyncpa [#allocation9], 0
    %17 = vsyncpa [#allocation4], 0
    %s18 = scalar_lea.sflag [#allocation4], 1
    %19 = vsyncpa %s18, 0
    loop: start=0, step=1, limit=4
    $region2: #{tpu_custom_call.1} parent=1 // loop_pre_header
      _
    $region3: #{tpu_custom_call.1} parent=1 // loop_header
      %s21 = sphi 0, %s25
      %p22 = scmp.ge.s32.totalorder %s21, 4
      %s31 = sphi 0, %s33
      %s34 = sphi 0, %s31
      %s35 = sphi 0, %s34
      %s51 = sphi 0, %s35
      %s57 = sphi 0, %s59
      %s60 = sphi 0, %s57
      %s61 = sphi 0, %s60
      %s77 = sphi 0, %s61
      %s81 = sphi 0, %s81
      %s83 = sphi 0, %s81
      %s84 = sphi 0, %s83
      %s98 = sphi 0, %s84
      %s102 = sphi 0, %s102
      %s104 = sphi 0, %s102
      %s105 = sphi 0, %s104
      %s119 = sphi 0, %s105
      %s123 = sphi 0, %s123
      %s125 = sphi 0, %s123
      %s126 = sphi 0, %s125
      %s140 = sphi 0, %s126
      %s146 = sphi 0, %s148
      %s149 = sphi 0, %s146
      %s150 = sphi 0, %s149
      %s166 = sphi 0, %s150
    $region4: #{tpu_custom_call.1} parent=1 // loop_header_branch
      %24 = sbr.rel (%p22) target = $region8
    $region5: #{tpu_custom_call.1} parent=1 // loop_body
      %s26 = ssub.s32 %s21, 1
      %s27 = ssub.s32 %s21, 2
      %s28 = sadd.s32 %s21, 1
      %s29 = ssub.s32 %s21, %s28
      %p30 = scmp.eq.s32.totalorder %s29, 0
      %s32 = sadd.s32 %s31, 1
      %s33 = scalar_select %p30, %s31, %s32
      %p36 = pneg %p30
      %p37 = scmp.eq.s32.totalorder %s21, 1
      %p38 = por %p36, %p37
      %p39 = scmp.ne.s32.totalorder %s31, %s34
      %p40 = scmp.eq.s32.totalorder %s21, 0
      %p41 = por %p39, %p40
      %p42 = scmp.ne.s32.totalorder %s31, %s34
      %p43 = scmp.eq.s32.totalorder %s26, 1
      %p44 = por %p42, %p43
      %p45 = scmp.ne.s32.totalorder %s34, %s35
      %p46 = scmp.eq.s32.totalorder %s26, 0
      %p47 = por %p45, %p46
      %p48 = scmp.ne.s32.totalorder %s34, %s35
      %p49 = scmp.eq.s32.totalorder %s27, 1
      %p50 = por %p48, %p49
      %p52 = scmp.ne.s32.totalorder %s35, %s51
      %p53 = scmp.eq.s32.totalorder %s27, 0
      %p54 = por %p52, %p53
      %s55 = ssub.s32 %s21, %s28
      %p56 = scmp.eq.s32.totalorder %s55, 0
      %s58 = sadd.s32 %s57, 1
      %s59 = scalar_select %p56, %s57, %s58
      %p62 = pneg %p56
      %p63 = scmp.eq.s32.totalorder %s21, 1
      %p64 = por %p62, %p63
      %p65 = scmp.ne.s32.totalorder %s57, %s60
      %p66 = scmp.eq.s32.totalorder %s21, 0
      %p67 = por %p65, %p66
      %p68 = scmp.ne.s32.totalorder %s57, %s60
      %p69 = scmp.eq.s32.totalorder %s26, 1
      %p70 = por %p68, %p69
      %p71 = scmp.ne.s32.totalorder %s60, %s61
      %p72 = scmp.eq.s32.totalorder %s26, 0
      %p73 = por %p71, %p72
      %p74 = scmp.ne.s32.totalorder %s60, %s61
      %p75 = scmp.eq.s32.totalorder %s27, 1
      %p76 = por %p74, %p75
      %p78 = scmp.ne.s32.totalorder %s61, %s77
      %p79 = scmp.eq.s32.totalorder %s27, 0
      %p80 = por %p78, %p79
      %s82 = sadd.s32 %s81, 1
      %p85 = scmp.eq.s32.totalorder %s21, 1
      %p86 = scmp.ne.s32.totalorder %s81, %s83
      %p87 = scmp.eq.s32.totalorder %s21, 0
      %p88 = por %p86, %p87
      %p89 = scmp.ne.s32.totalorder %s81, %s83
      %p90 = scmp.eq.s32.totalorder %s26, 1
      %p91 = por %p89, %p90
      %p92 = scmp.ne.s32.totalorder %s83, %s84
      %p93 = scmp.eq.s32.totalorder %s26, 0
      %p94 = por %p92, %p93
      %p95 = scmp.ne.s32.totalorder %s83, %s84
      %p96 = scmp.eq.s32.totalorder %s27, 1
      %p97 = por %p95, %p96
      %p99 = scmp.ne.s32.totalorder %s84, %s98
      %p100 = scmp.eq.s32.totalorder %s27, 0
      %p101 = por %p99, %p100
      %s103 = sadd.s32 %s102, 1
      %p106 = scmp.eq.s32.totalorder %s21, 1
      %p107 = scmp.ne.s32.totalorder %s102, %s104
      %p108 = scmp.eq.s32.totalorder %s21, 0
      %p109 = por %p107, %p108
      %p110 = scmp.ne.s32.totalorder %s102, %s104
      %p111 = scmp.eq.s32.totalorder %s26, 1
      %p112 = por %p110, %p111
      %p113 = scmp.ne.s32.totalorder %s104, %s105
      %p114 = scmp.eq.s32.totalorder %s26, 0
      %p115 = por %p113, %p114
      %p116 = scmp.ne.s32.totalorder %s104, %s105
      %p117 = scmp.eq.s32.totalorder %s27, 1
      %p118 = por %p116, %p117
      %p120 = scmp.ne.s32.totalorder %s105, %s119
      %p121 = scmp.eq.s32.totalorder %s27, 0
      %p122 = por %p120, %p121
      %s124 = sadd.s32 %s123, 1
      %p127 = scmp.eq.s32.totalorder %s21, 1
      %p128 = scmp.ne.s32.totalorder %s123, %s125
      %p129 = scmp.eq.s32.totalorder %s21, 0
      %p130 = por %p128, %p129
      %p131 = scmp.ne.s32.totalorder %s123, %s125
      %p132 = scmp.eq.s32.totalorder %s26, 1
      %p133 = por %p131, %p132
      %p134 = scmp.ne.s32.totalorder %s125, %s126
      %p135 = scmp.eq.s32.totalorder %s26, 0
      %p136 = por %p134, %p135
      %p137 = scmp.ne.s32.totalorder %s125, %s126
      %p138 = scmp.eq.s32.totalorder %s27, 1
      %p139 = por %p137, %p138
      %p141 = scmp.ne.s32.totalorder %s126, %s140
      %p142 = scmp.eq.s32.totalorder %s27, 0
      %p143 = por %p141, %p142
      %s144 = ssub.s32 %s21, %s28
      %p145 = scmp.eq.s32.totalorder %s144, 0
      %s147 = sadd.s32 %s146, 1
      %s148 = scalar_select %p145, %s146, %s147
      %p151 = pneg %p145
      %p152 = scmp.eq.s32.totalorder %s21, 1
      %p153 = por %p151, %p152
      %p154 = scmp.ne.s32.totalorder %s146, %s149
      %p155 = scmp.eq.s32.totalorder %s21, 0
      %p156 = por %p154, %p155
      %p157 = scmp.ne.s32.totalorder %s146, %s149
      %p158 = scmp.eq.s32.totalorder %s26, 1
      %p159 = por %p157, %p158
      %p160 = scmp.ne.s32.totalorder %s149, %s150
      %p161 = scmp.eq.s32.totalorder %s26, 0
      %p162 = por %p160, %p161
      %p163 = scmp.ne.s32.totalorder %s149, %s150
      %p164 = scmp.eq.s32.totalorder %s27, 1
      %p165 = por %p163, %p164
      %p167 = scmp.ne.s32.totalorder %s150, %s166
      %p168 = scmp.eq.s32.totalorder %s27, 0
      %p169 = por %p167, %p168
      %p170 = scmp.le.s32.totalorder 1, %s21
      %p171 = scmp.lt.s32.totalorder %s21, 3
      %p172 = pnand %p170, %p171
      %p173 = pneg %p172
      // Predicated region
      $region9: #{tpu_custom_call.1} parent=5 // pred_check
        _
      $region10: #{tpu_custom_call.1} parent=5 // pred_check_branch
        %175 = sbr.rel (%p172) target = $region12
      $region11: #{tpu_custom_call.1} parent=5 // pred_region
        %s176 = ssub.s32 %s21, 1
        // Predicated region
        $region13: #{tpu_custom_call.1} parent=11 // pred_check
          %p177 = pneg %p94
        $region14: #{tpu_custom_call.1} parent=11 // pred_check_branch
          %179 = sbr.rel (%p177) target = $region16
        $region15: #{tpu_custom_call.1} parent=11 // pred_region
          %s181 = ssub.s32 25600, 25600
          %182 = vsyncadd [#allocation6], %s181
          %s183 = sshll.u32 [#allocation7], 4
          %s184 = int_to_ptr.vmem [resolvable:$true] %s183
          %189 = dma.hbm_to_vmem [thread:$0]  %s2, 25600, %s184, [#allocation6], 512, 512, 32
        $region16: #{tpu_custom_call.1} parent=11 // pred_fallthru
          _
        // Predicated region
        $region17: #{tpu_custom_call.1} parent=11 // pred_check
          %p190 = pneg %p115
        $region18: #{tpu_custom_call.1} parent=11 // pred_check_branch
          %192 = sbr.rel (%p190) target = $region20
        $region19: #{tpu_custom_call.1} parent=11 // pred_region
          %s194 = ssub.s32 2048, 2048
          %195 = vsyncadd [#allocation9], %s194
          %s196 = sshll.u32 [#allocation8], 4
          %s197 = int_to_ptr.vmem [resolvable:$true] %s196
          %202 = dma.hbm_to_vmem [thread:$0]  %s3, 2048, %s197, [#allocation9], 512, 512, 32
        $region20: #{tpu_custom_call.1} parent=11 // pred_fallthru
          _
        // Predicated region
        $region21: #{tpu_custom_call.1} parent=11 // pred_check
          %p203 = pneg %p136
        $region22: #{tpu_custom_call.1} parent=11 // pred_check_branch
          %205 = sbr.rel (%p203) target = $region24
        $region23: #{tpu_custom_call.1} parent=11 // pred_region
          _
        $region24: #{tpu_custom_call.1} parent=11 // pred_fallthru
          _
      $region12: #{tpu_custom_call.1} parent=5 // pred_fallthru
        _
      %p206 = scmp.lt.s32.totalorder %s21, 2
      // Predicated region
      $region25: #{tpu_custom_call.1} parent=5 // pred_check
        %p207 = pneg %p206
      $region26: #{tpu_custom_call.1} parent=5 // pred_check_branch
        %209 = sbr.rel (%p207) target = $region28
      $region27: #{tpu_custom_call.1} parent=5 // pred_region
        // Predicated region
        $region29: #{tpu_custom_call.1} parent=27 // pred_check
          %p210 = pneg %p41
        $region30: #{tpu_custom_call.1} parent=27 // pred_check_branch
          %212 = sbr.rel (%p210) target = $region32
        $region31: #{tpu_custom_call.1} parent=27 // pred_region
          %s213 = sand.u32 %s31, 1
          %s214 = scalar_lea.sflag [#allocation3], %s213
          %s215 = sand.u32 %s31, 1
          %s216 = smul.addr %s215, 32
          %s217 = scalar_lea.vmem [#allocation2], %s216
          %s219 = ssub.s32 512, 512
          %220 = vsyncadd %s214, %s219
          %s221 = smul.addr %s21, 4
          %s222 = smul.addr %s221, 128
          %s223 = scalar_lea.hbm %s0, %s222
          %s225 = sshll.u32 %s217, 4
          %s226 = int_to_ptr.vmem [resolvable:$true] %s225
          %228 = dma.hbm_to_vmem [thread:$0]  %s223, 512, %s226, %s214
        $region32: #{tpu_custom_call.1} parent=27 // pred_fallthru
          _
        // Predicated region
        $region33: #{tpu_custom_call.1} parent=27 // pred_check
          %p229 = pneg %p67
        $region34: #{tpu_custom_call.1} parent=27 // pred_check_branch
          %231 = sbr.rel (%p229) target = $region36
        $region35: #{tpu_custom_call.1} parent=27 // pred_region
          %s232 = sand.u32 %s21, 1
          %s233 = scalar_lea.sflag [#allocation6], %s232
          %s234 = sand.u32 %s57, 1
          %s235 = smul.addr %s234, 8
          %s236 = scalar_lea.vmem [#allocation5], %s235
          %s238 = ssub.s32 128, 128
          %239 = vsyncadd %s233, %s238
          %s240 = smul.addr %s21, 128
          %s241 = scalar_lea.hbm %s1, %s240
          %s243 = sshll.u32 %s236, 4
          %s244 = int_to_ptr.vmem [resolvable:$true] %s243
          %246 = dma.hbm_to_vmem [thread:$0]  %s241, 128, %s244, %s233
        $region36: #{tpu_custom_call.1} parent=27 // pred_fallthru
          _
      $region28: #{tpu_custom_call.1} parent=5 // pred_fallthru
        _
      %p247 = scmp.le.s32.totalorder 1, %s21
      %p248 = scmp.lt.s32.totalorder %s21, 3
      %p249 = pnand %p247, %p248
      %p250 = pneg %p249
      // Predicated region
      $region37: #{tpu_custom_call.1} parent=5 // pred_check
        _
      $region38: #{tpu_custom_call.1} parent=5 // pred_check_branch
        %252 = sbr.rel (%p249) target = $region40
      $region39: #{tpu_custom_call.1} parent=5 // pred_region
        %s253 = ssub.s32 %s21, 1
        %s254 = sand.u32 %s34, 1
        %s255 = scalar_lea.sflag [#allocation3], %s254
        %s256 = sand.u32 %s34, 1
        %s257 = smul.addr %s256, 32
        %s258 = scalar_lea.vmem [#allocation2], %s257
        // Predicated region
        $region41: #{tpu_custom_call.1} parent=39 // pred_check
          %p259 = pneg %p47
        $region42: #{tpu_custom_call.1} parent=39 // pred_check_branch
          %261 = sbr.rel (%p259) target = $region44
        $region43: #{tpu_custom_call.1} parent=39 // pred_region
          %262 = dma.done %s255, 512
        $region44: #{tpu_custom_call.1} parent=39 // pred_fallthru
          _
        %s263 = sand.u32 %s26, 1
        %s264 = scalar_lea.sflag [#allocation6], %s263
        %s265 = sand.u32 %s60, 1
        %s266 = smul.addr %s265, 8
        %s267 = scalar_lea.vmem [#allocation5], %s266
        // Predicated region
        $region45: #{tpu_custom_call.1} parent=39 // pred_check
          %p268 = pneg %p73
        $region46: #{tpu_custom_call.1} parent=39 // pred_check_branch
          %270 = sbr.rel (%p268) target = $region48
        $region47: #{tpu_custom_call.1} parent=39 // pred_region
          %271 = dma.done %s264, 128
        $region48: #{tpu_custom_call.1} parent=39 // pred_fallthru
          _
        // Predicated region
        $region49: #{tpu_custom_call.1} parent=39 // pred_check
          %p272 = pneg %p94
        $region50: #{tpu_custom_call.1} parent=39 // pred_check_branch
          %274 = sbr.rel (%p272) target = $region52
        $region51: #{tpu_custom_call.1} parent=39 // pred_region
          %275 = dma.done [#allocation6], 25600
        $region52: #{tpu_custom_call.1} parent=39 // pred_fallthru
          _
        // Predicated region
        $region53: #{tpu_custom_call.1} parent=39 // pred_check
          %p276 = pneg %p115
        $region54: #{tpu_custom_call.1} parent=39 // pred_check_branch
          %278 = sbr.rel (%p276) target = $region56
        $region55: #{tpu_custom_call.1} parent=39 // pred_region
          %279 = dma.done [#allocation9], 2048
        $region56: #{tpu_custom_call.1} parent=39 // pred_fallthru
          _
        %s280 = sand.u32 %s34, 1
        %s281 = scalar_lea.sflag [#allocation3], %s280
        %s282 = sand.u32 %s34, 1
        %s283 = smul.addr %s282, 32
        %s284 = scalar_lea.vmem [#allocation2], %s283
        %p285 = pneg %p47
        %p286 = pneg %p44
        %s287 = sand.u32 %s26, 1
        %s288 = scalar_lea.sflag [#allocation6], %s287
        %s289 = sand.u32 %s60, 1
        %s290 = smul.addr %s289, 8
        %s291 = scalar_lea.vmem [#allocation5], %s290
        %p292 = pneg %p73
        %p293 = pneg %p70
        %p294 = pneg %p94
        %p295 = pneg %p91
        %p296 = pneg %p115
        %p297 = pneg %p112
        %p298 = pneg %p136
        %p299 = pneg %p133
        %p300 = pneg %p162
        %p301 = pneg %p159
        %s302 = sand.u32 %s149, 1
        %s303 = scalar_lea.sflag [#allocation4], %s302
        %s304 = sand.u32 %s149, 1
        %s305 = smul.addr %s304, 32
        %s306 = scalar_lea.vmem [#allocation10], %s305
        %v307 = vld [vmem:[%s258] sm:$0xff]
        %v308 = vld [vmem:[%s258 + $0x8] sm:$0xff]
        %v309 = vld [vmem:[%s258 + $0x10] sm:$0xff]
        %v310 = vld [vmem:[%s258 + $0x18] sm:$0xff]
        %v311 = vld [vmem:[#allocation7] sm:$0xff]
        %v312 = vld [vmem:[#allocation7 + $0x8] sm:$0xff]
        %v313 = vld [vmem:[#allocation7 + $0x10] sm:$0xff]
        %v314 = vld [vmem:[#allocation7 + $0x18] sm:$0xff]
        %v315 = vld [vmem:[#allocation7 + $0x20] sm:$0xff]
        %v316 = vld [vmem:[#allocation7 + $0x28] sm:$0xff]
        %v317 = vld [vmem:[#allocation7 + $0x30] sm:$0xff]
        %v318 = vld [vmem:[#allocation7 + $0x38] sm:$0xff]
        %v319 = vld [vmem:[#allocation7 + $0x40] sm:$0xff]
        %v320 = vld [vmem:[#allocation7 + $0x48] sm:$0xff]
        %v321 = vld [vmem:[#allocation7 + $0x50] sm:$0xff]
        %v322 = vld [vmem:[#allocation7 + $0x58] sm:$0xff]
        %v323 = vld [vmem:[#allocation7 + $0x60] sm:$0xff]
        %v324 = vld [vmem:[#allocation7 + $0x68] sm:$0xff]
        %v325 = vld [vmem:[#allocation7 + $0x70] sm:$0xff]
        %v326 = vld [vmem:[#allocation7 + $0x78] sm:$0xff]
        %v327 = vld [vmem:[#allocation7 + $0x80] sm:$0xff]
        %v328 = vld [vmem:[#allocation7 + $0x88] sm:$0xff]
        %v329 = vld [vmem:[#allocation7 + $0x90] sm:$0xff]
        %v330 = vld [vmem:[#allocation7 + $0x98] sm:$0xff]
        %v331 = vld [vmem:[#allocation7 + $0xa0] sm:$0xff]
        %v332 = vld [vmem:[#allocation7 + $0xa8] sm:$0xff]
        %v333 = vld [vmem:[#allocation7 + $0xb0] sm:$0xff]
        %v334 = vld [vmem:[#allocation7 + $0xb8] sm:$0xff]
        %v335 = vld [vmem:[#allocation7 + $0xc0] sm:$0xff]
        %v336 = vld [vmem:[#allocation7 + $0xc8] sm:$0xff]
        %v337 = vld [vmem:[#allocation7 + $0xd0] sm:$0xff]
        %v338 = vld [vmem:[#allocation7 + $0xd8] sm:$0xff]
        %v339 = vld [vmem:[#allocation7 + $0xe0] sm:$0xff]
        %v340 = vld [vmem:[#allocation7 + $0xe8] sm:$0xff]
        %v341 = vld [vmem:[#allocation7 + $0xf0] sm:$0xff]
        %v342 = vld [vmem:[#allocation7 + $0xf8] sm:$0xff]
        %v343 = vld [vmem:[#allocation7 + $0x100] sm:$0xff]
        %v344 = vld [vmem:[#allocation7 + $0x108] sm:$0xff]
        %v345 = vld [vmem:[#allocation7 + $0x110] sm:$0xff]
        %v346 = vld [vmem:[#allocation7 + $0x118] sm:$0xff]
        %v347 = vld [vmem:[#allocation7 + $0x120] sm:$0xff]
        %v348 = vld [vmem:[#allocation7 + $0x128] sm:$0xff]
        %v349 = vld [vmem:[#allocation7 + $0x130] sm:$0xff]
        %v350 = vld [vmem:[#allocation7 + $0x138] sm:$0xff]
        %v351 = vld [vmem:[#allocation7 + $0x140] sm:$0xff]
        %v352 = vld [vmem:[#allocation7 + $0x148] sm:$0xff]
        %v353 = vld [vmem:[#allocation7 + $0x150] sm:$0xff]
        %v354 = vld [vmem:[#allocation7 + $0x158] sm:$0xff]
        %v355 = vld [vmem:[#allocation7 + $0x160] sm:$0xff]
        %v356 = vld [vmem:[#allocation7 + $0x168] sm:$0xff]
        %v357 = vld [vmem:[#allocation7 + $0x170] sm:$0xff]
        %v358 = vld [vmem:[#allocation7 + $0x178] sm:$0xff]
        %v359 = vld [vmem:[#allocation7 + $0x180] sm:$0xff]
        %v360 = vld [vmem:[#allocation7 + $0x188] sm:$0xff]
        %v361 = vld [vmem:[#allocation7 + $0x190] sm:$0xff]
        %v362 = vld [vmem:[#allocation7 + $0x198] sm:$0xff]
        %v363 = vld [vmem:[#allocation7 + $0x1a0] sm:$0xff]
        %v364 = vld [vmem:[#allocation7 + $0x1a8] sm:$0xff]
        %v365 = vld [vmem:[#allocation7 + $0x1b0] sm:$0xff]
        %v366 = vld [vmem:[#allocation7 + $0x1b8] sm:$0xff]
        %v367 = vld [vmem:[#allocation7 + $0x1c0] sm:$0xff]
        %v368 = vld [vmem:[#allocation7 + $0x1c8] sm:$0xff]
        %v369 = vld [vmem:[#allocation7 + $0x1d0] sm:$0xff]
        %v370 = vld [vmem:[#allocation7 + $0x1d8] sm:$0xff]
        %v371 = vld [vmem:[#allocation7 + $0x1e0] sm:$0xff]
        %v372 = vld [vmem:[#allocation7 + $0x1e8] sm:$0xff]
        %v373 = vld [vmem:[#allocation7 + $0x1f0] sm:$0xff]
        %v374 = vld [vmem:[#allocation7 + $0x1f8] sm:$0xff]
        %v375 = vld [vmem:[#allocation7 + $0x200] sm:$0xff]
        %v376 = vld [vmem:[#allocation7 + $0x208] sm:$0xff]
        %v377 = vld [vmem:[#allocation7 + $0x210] sm:$0xff]
        %v378 = vld [vmem:[#allocation7 + $0x218] sm:$0xff]
        %v379 = vld [vmem:[#allocation7 + $0x220] sm:$0xff]
        %v380 = vld [vmem:[#allocation7 + $0x228] sm:$0xff]
        %v381 = vld [vmem:[#allocation7 + $0x230] sm:$0xff]
        %v382 = vld [vmem:[#allocation7 + $0x238] sm:$0xff]
        %v383 = vld [vmem:[#allocation7 + $0x240] sm:$0xff]
        %v384 = vld [vmem:[#allocation7 + $0x248] sm:$0xff]
        %v385 = vld [vmem:[#allocation7 + $0x250] sm:$0xff]
        %v386 = vld [vmem:[#allocation7 + $0x258] sm:$0xff]
        %v387 = vld [vmem:[#allocation7 + $0x260] sm:$0xff]
        %v388 = vld [vmem:[#allocation7 + $0x268] sm:$0xff]
        %v389 = vld [vmem:[#allocation7 + $0x270] sm:$0xff]
        %v390 = vld [vmem:[#allocation7 + $0x278] sm:$0xff]
        %v391 = vld [vmem:[#allocation7 + $0x280] sm:$0xff]
        %v392 = vld [vmem:[#allocation7 + $0x288] sm:$0xff]
        %v393 = vld [vmem:[#allocation7 + $0x290] sm:$0xff]
        %v394 = vld [vmem:[#allocation7 + $0x298] sm:$0xff]
        %v395 = vld [vmem:[#allocation7 + $0x2a0] sm:$0xff]
        %v396 = vld [vmem:[#allocation7 + $0x2a8] sm:$0xff]
        %v397 = vld [vmem:[#allocation7 + $0x2b0] sm:$0xff]
        %v398 = vld [vmem:[#allocation7 + $0x2b8] sm:$0xff]
        %v399 = vld [vmem:[#allocation7 + $0x2c0] sm:$0xff]
        %v400 = vld [vmem:[#allocation7 + $0x2c8] sm:$0xff]
        %v401 = vld [vmem:[#allocation7 + $0x2d0] sm:$0xff]
        %v402 = vld [vmem:[#allocation7 + $0x2d8] sm:$0xff]
        %v403 = vld [vmem:[#allocation7 + $0x2e0] sm:$0xff]
        %v404 = vld [vmem:[#allocation7 + $0x2e8] sm:$0xff]
        %v405 = vld [vmem:[#allocation7 + $0x2f0] sm:$0xff]
        %v406 = vld [vmem:[#allocation7 + $0x2f8] sm:$0xff]
        %v407 = vld [vmem:[#allocation7 + $0x300] sm:$0xff]
        %v408 = vld [vmem:[#allocation7 + $0x308] sm:$0xff]
        %v409 = vld [vmem:[#allocation7 + $0x310] sm:$0xff]
        %v410 = vld [vmem:[#allocation7 + $0x318] sm:$0xff]
        %v411 = vld [vmem:[#allocation7 + $0x320] sm:$0xff]
        %v412 = vld [vmem:[#allocation7 + $0x328] sm:$0xff]
        %v413 = vld [vmem:[#allocation7 + $0x330] sm:$0xff]
        %v414 = vld [vmem:[#allocation7 + $0x338] sm:$0xff]
        %v415 = vld [vmem:[#allocation7 + $0x340] sm:$0xff]
        %v416 = vld [vmem:[#allocation7 + $0x348] sm:$0xff]
        %v417 = vld [vmem:[#allocation7 + $0x350] sm:$0xff]
        %v418 = vld [vmem:[#allocation7 + $0x358] sm:$0xff]
        %v419 = vld [vmem:[#allocation7 + $0x360] sm:$0xff]
        %v420 = vld [vmem:[#allocation7 + $0x368] sm:$0xff]
        %v421 = vld [vmem:[#allocation7 + $0x370] sm:$0xff]
        %v422 = vld [vmem:[#allocation7 + $0x378] sm:$0xff]
        %v423 = vld [vmem:[#allocation7 + $0x380] sm:$0xff]
        %v424 = vld [vmem:[#allocation7 + $0x388] sm:$0xff]
        %v425 = vld [vmem:[#allocation7 + $0x390] sm:$0xff]
        %v426 = vld [vmem:[#allocation7 + $0x398] sm:$0xff]
        %v427 = vld [vmem:[#allocation7 + $0x3a0] sm:$0xff]
        %v428 = vld [vmem:[#allocation7 + $0x3a8] sm:$0xff]
        %v429 = vld [vmem:[#allocation7 + $0x3b0] sm:$0xff]
        %v430 = vld [vmem:[#allocation7 + $0x3b8] sm:$0xff]
        %v431 = vld [vmem:[#allocation7 + $0x3c0] sm:$0xff]
        %v432 = vld [vmem:[#allocation7 + $0x3c8] sm:$0xff]
        %v433 = vld [vmem:[#allocation7 + $0x3d0] sm:$0xff]
        %v434 = vld [vmem:[#allocation7 + $0x3d8] sm:$0xff]
        %v435 = vld [vmem:[#allocation7 + $0x3e0] sm:$0xff]
        %v436 = vld [vmem:[#allocation7 + $0x3e8] sm:$0xff]
        %v437 = vld [vmem:[#allocation7 + $0x3f0] sm:$0xff]
        %v438 = vld [vmem:[#allocation7 + $0x3f8] sm:$0xff]
        %v439 = vld [vmem:[#allocation7 + $0x400] sm:$0xff]
        %v440 = vld [vmem:[#allocation7 + $0x408] sm:$0xff]
        %v441 = vld [vmem:[#allocation7 + $0x410] sm:$0xff]
        %v442 = vld [vmem:[#allocation7 + $0x418] sm:$0xff]
        %v443 = vld [vmem:[#allocation7 + $0x420] sm:$0xff]
        %v444 = vld [vmem:[#allocation7 + $0x428] sm:$0xff]
        %v445 = vld [vmem:[#allocation7 + $0x430] sm:$0xff]
        %v446 = vld [vmem:[#allocation7 + $0x438] sm:$0xff]
        %v447 = vld [vmem:[#allocation7 + $0x440] sm:$0xff]
        %v448 = vld [vmem:[#allocation7 + $0x448] sm:$0xff]
        %v449 = vld [vmem:[#allocation7 + $0x450] sm:$0xff]
        %v450 = vld [vmem:[#allocation7 + $0x458] sm:$0xff]
        %v451 = vld [vmem:[#allocation7 + $0x460] sm:$0xff]
        %v452 = vld [vmem:[#allocation7 + $0x468] sm:$0xff]
        %v453 = vld [vmem:[#allocation7 + $0x470] sm:$0xff]
        %v454 = vld [vmem:[#allocation7 + $0x478] sm:$0xff]
        %v455 = vld [vmem:[#allocation7 + $0x480] sm:$0xff]
        %v456 = vld [vmem:[#allocation7 + $0x488] sm:$0xff]
        %v457 = vld [vmem:[#allocation7 + $0x490] sm:$0xff]
        %v458 = vld [vmem:[#allocation7 + $0x498] sm:$0xff]
        %v459 = vld [vmem:[#allocation7 + $0x4a0] sm:$0xff]
        %v460 = vld [vmem:[#allocation7 + $0x4a8] sm:$0xff]
        %v461 = vld [vmem:[#allocation7 + $0x4b0] sm:$0xff]
        %v462 = vld [vmem:[#allocation7 + $0x4b8] sm:$0xff]
        %v463 = vld [vmem:[#allocation7 + $0x4c0] sm:$0xff]
        %v464 = vld [vmem:[#allocation7 + $0x4c8] sm:$0xff]
        %v465 = vld [vmem:[#allocation7 + $0x4d0] sm:$0xff]
        %v466 = vld [vmem:[#allocation7 + $0x4d8] sm:$0xff]
        %v467 = vld [vmem:[#allocation7 + $0x4e0] sm:$0xff]
        %v468 = vld [vmem:[#allocation7 + $0x4e8] sm:$0xff]
        %v469 = vld [vmem:[#allocation7 + $0x4f0] sm:$0xff]
        %v470 = vld [vmem:[#allocation7 + $0x4f8] sm:$0xff]
        %v471 = vld [vmem:[#allocation7 + $0x500] sm:$0xff]
        %v472 = vld [vmem:[#allocation7 + $0x508] sm:$0xff]
        %v473 = vld [vmem:[#allocation7 + $0x510] sm:$0xff]
        %v474 = vld [vmem:[#allocation7 + $0x518] sm:$0xff]
        %v475 = vld [vmem:[#allocation7 + $0x520] sm:$0xff]
        %v476 = vld [vmem:[#allocation7 + $0x528] sm:$0xff]
        %v477 = vld [vmem:[#allocation7 + $0x530] sm:$0xff]
        %v478 = vld [vmem:[#allocation7 + $0x538] sm:$0xff]
        %v479 = vld [vmem:[#allocation7 + $0x540] sm:$0xff]
        %v480 = vld [vmem:[#allocation7 + $0x548] sm:$0xff]
        %v481 = vld [vmem:[#allocation7 + $0x550] sm:$0xff]
        %v482 = vld [vmem:[#allocation7 + $0x558] sm:$0xff]
        %v483 = vld [vmem:[#allocation7 + $0x560] sm:$0xff]
        %v484 = vld [vmem:[#allocation7 + $0x568] sm:$0xff]
        %v485 = vld [vmem:[#allocation7 + $0x570] sm:$0xff]
        %v486 = vld [vmem:[#allocation7 + $0x578] sm:$0xff]
        %v487 = vld [vmem:[#allocation7 + $0x580] sm:$0xff]
        %v488 = vld [vmem:[#allocation7 + $0x588] sm:$0xff]
        %v489 = vld [vmem:[#allocation7 + $0x590] sm:$0xff]
        %v490 = vld [vmem:[#allocation7 + $0x598] sm:$0xff]
        %v491 = vld [vmem:[#allocation7 + $0x5a0] sm:$0xff]
        %v492 = vld [vmem:[#allocation7 + $0x5a8] sm:$0xff]
        %v493 = vld [vmem:[#allocation7 + $0x5b0] sm:$0xff]
        %v494 = vld [vmem:[#allocation7 + $0x5b8] sm:$0xff]
        %v495 = vld [vmem:[#allocation7 + $0x5c0] sm:$0xff]
        %v496 = vld [vmem:[#allocation7 + $0x5c8] sm:$0xff]
        %v497 = vld [vmem:[#allocation7 + $0x5d0] sm:$0xff]
        %v498 = vld [vmem:[#allocation7 + $0x5d8] sm:$0xff]
        %v499 = vld [vmem:[#allocation7 + $0x5e0] sm:$0xff]
        %v500 = vld [vmem:[#allocation7 + $0x5e8] sm:$0xff]
        %v501 = vld [vmem:[#allocation7 + $0x5f0] sm:$0xff]
        %v502 = vld [vmem:[#allocation7 + $0x5f8] sm:$0xff]
        %v503 = vld [vmem:[#allocation7 + $0x600] sm:$0xff]
        %v504 = vld [vmem:[#allocation7 + $0x608] sm:$0xff]
        %v505 = vld [vmem:[#allocation7 + $0x610] sm:$0xff]
        %v506 = vld [vmem:[#allocation7 + $0x618] sm:$0xff]
        %v507 = vld [vmem:[#allocation7 + $0x620] sm:$0xff]
        %v508 = vld [vmem:[#allocation7 + $0x628] sm:$0xff]
        %v509 = vld [vmem:[#allocation7 + $0x630] sm:$0xff]
        %v510 = vld [vmem:[#allocation7 + $0x638] sm:$0xff]
        %v511 = vld [vmem:[%s267] sm:$0xff]
        %v512 = vld [vmem:[#allocation8] sm:$0xff]
        %v513 = vld [vmem:[#allocation8 + $0x8] sm:$0xff]
        %v514 = vld [vmem:[#allocation8 + $0x10] sm:$0xff]
        %v515 = vld [vmem:[#allocation8 + $0x18] sm:$0xff]
        %v516 = vld [vmem:[#allocation8 + $0x20] sm:$0xff]
        %v517 = vld [vmem:[#allocation8 + $0x28] sm:$0xff]
        %v518 = vld [vmem:[#allocation8 + $0x30] sm:$0xff]
        %v519 = vld [vmem:[#allocation8 + $0x38] sm:$0xff]
        %v520 = vld [vmem:[#allocation8 + $0x40] sm:$0xff]
        %v521 = vld [vmem:[#allocation8 + $0x48] sm:$0xff]
        %v522 = vld [vmem:[#allocation8 + $0x50] sm:$0xff]
        %v523 = vld [vmem:[#allocation8 + $0x58] sm:$0xff]
        %v524 = vld [vmem:[#allocation8 + $0x60] sm:$0xff]
        %v525 = vld [vmem:[#allocation8 + $0x68] sm:$0xff]
        %v526 = vld [vmem:[#allocation8 + $0x70] sm:$0xff]
        %v527 = vld [vmem:[#allocation8 + $0x78] sm:$0xff]
        %vm528 = vcmask 261120
        %v530 = vsel %vm528, %v511, 0
        %532 = vmatprep.subr.mxu0 %v513
        %533 = vmatpush1.msra.mxu0 %v512
        %534 = vmatprep.subr.mxu0 %v517
        %535 = vmatpush1.msra.mxu0 %v516
        %536 = vmatprep.subr.mxu0 %v521
        %537 = vmatpush1.msra.mxu0 %v520
        %538 = vmatprep.subr.mxu0 %v525
        %539 = vmatpush1.msra.mxu0 %v524
        %540 = vmatprep.subr.mxu0 0.0
        %541 = vmatpush1.msra.mxu0 0.0
        %542 = vmatprep.subr.mxu0 0.0
        %543 = vmatpush1.msra.mxu0 0.0
        %544 = vmatprep.subr.mxu0 0.0
        %545 = vmatpush1.msra.mxu0 0.0
        %546 = vmatprep.subr.mxu0 0.0
        %547 = vmatpush1.msra.mxu0 0.0
        %548 = vmatprep.subr.mxu0 0.0
        %549 = vmatpush1.msra.mxu0 0.0
        %550 = vmatprep.subr.mxu0 0.0
        %551 = vmatpush1.msra.mxu0 0.0
        %552 = vmatprep.subr.mxu0 0.0
        %553 = vmatpush1.msra.mxu0 0.0
        %554 = vmatprep.subr.mxu0 0.0
        %555 = vmatpush1.msra.mxu0 0.0
        %556 = vmatprep.subr.mxu0 0.0
        %557 = vmatpush1.msra.mxu0 0.0
        %558 = vmatprep.subr.mxu0 0.0
        %559 = vmatpush1.msra.mxu0 0.0
        %560 = vmatprep.subr.mxu0 0.0
        %561 = vmatpush1.msra.mxu0 0.0
        %562 = vmatprep.subr.mxu0 0.0
        %563 = vmatpush1.msra.mxu0 0.0
        %564 = vmatprep.subr.mxu0 0.0
        %565 = vmatpush1.msra.mxu0 0.0
        %566 = vmatprep.subr.mxu0 0.0
        %567 = vmatpush1.msra.mxu0 0.0
        %568 = vmatprep.subr.mxu0 0.0
        %569 = vmatpush1.msra.mxu0 0.0
        %570 = vmatprep.subr.mxu0 0.0
        %571 = vmatpush1.msra.mxu0 0.0
        %572 = vmatprep.subr.mxu0 0.0
        %573 = vmatpush1.msra.mxu0 0.0
        %574 = vmatprep.subr.mxu0 0.0
        %575 = vmatpush1.msra.mxu0 0.0
        %576 = vmatprep.subr.mxu0 0.0
        %577 = vmatpush1.msra.mxu0 0.0
        %578 = vmatprep.subr.mxu0 0.0
        %579 = vmatpush1.msra.mxu0 0.0
        %580 = vmatprep.subr.mxu0 0.0
        %581 = vmatpush1.msra.mxu0 0.0
        %582 = vmatprep.subr.mxu0 0.0
        %583 = vmatpush1.msra.mxu0 0.0
        %584 = vmatprep.subr.mxu0 0.0
        %585 = vmatpush1.msra.mxu0 0.0
        %586 = vmatprep.subr.mxu0 0.0
        %587 = vmatpush1.msra.mxu0 0.0
        %588 = vmatprep.subr.mxu0 0.0
        %589 = vmatpush1.msra.mxu0 0.0
        %590 = vmatprep.subr.mxu0 0.0
        %591 = vmatpush1.msra.mxu0 0.0
        %592 = vmatprep.subr.mxu0 0.0
        %593 = vmatpush1.msra.mxu0 0.0
        %594 = vmatprep.subr.mxu0 0.0
        %595 = vmatpush1.msra.mxu0 0.0
        %596 = vmatprep.mubr.f32.mxu0 0.0
        %597 = vmatmul.mubr.f32.gmra.mrb[0].mxu0 %v530
        %v598 = vpop.f32.mrb[0].mxu0
        %v599 = vadd.f32 0.0, %v598
        %v600 = vpop.f32.mrb[0].mxu0
        %v601 = vadd.f32 0.0, %v600
        %602 = vdwg.mxu0
        %603 = vmatprep.subr.mxu0 %v515
        %604 = vmatpush1.msra.mxu0 %v514
        %605 = vmatprep.subr.mxu0 %v519
        %606 = vmatpush1.msra.mxu0 %v518
        %607 = vmatprep.subr.mxu0 %v523
        %608 = vmatpush1.msra.mxu0 %v522
        %609 = vmatprep.subr.mxu0 %v527
        %610 = vmatpush1.msra.mxu0 %v526
        %611 = vmatprep.subr.mxu0 0.0
        %612 = vmatpush1.msra.mxu0 0.0
        %613 = vmatprep.subr.mxu0 0.0
        %614 = vmatpush1.msra.mxu0 0.0
        %615 = vmatprep.subr.mxu0 0.0
        %616 = vmatpush1.msra.mxu0 0.0
        %617 = vmatprep.subr.mxu0 0.0
        %618 = vmatpush1.msra.mxu0 0.0
        %619 = vmatprep.subr.mxu0 0.0
        %620 = vmatpush1.msra.mxu0 0.0
        %621 = vmatprep.subr.mxu0 0.0
        %622 = vmatpush1.msra.mxu0 0.0
        %623 = vmatprep.subr.mxu0 0.0
        %624 = vmatpush1.msra.mxu0 0.0
        %625 = vmatprep.subr.mxu0 0.0
        %626 = vmatpush1.msra.mxu0 0.0
        %627 = vmatprep.subr.mxu0 0.0
        %628 = vmatpush1.msra.mxu0 0.0
        %629 = vmatprep.subr.mxu0 0.0
        %630 = vmatpush1.msra.mxu0 0.0
        %631 = vmatprep.subr.mxu0 0.0
        %632 = vmatpush1.msra.mxu0 0.0
        %633 = vmatprep.subr.mxu0 0.0
        %634 = vmatpush1.msra.mxu0 0.0
        %635 = vmatprep.subr.mxu0 0.0
        %636 = vmatpush1.msra.mxu0 0.0
        %637 = vmatprep.subr.mxu0 0.0
        %638 = vmatpush1.msra.mxu0 0.0
        %639 = vmatprep.subr.mxu0 0.0
        %640 = vmatpush1.msra.mxu0 0.0
        %641 = vmatprep.subr.mxu0 0.0
        %642 = vmatpush1.msra.mxu0 0.0
        %643 = vmatprep.subr.mxu0 0.0
        %644 = vmatpush1.msra.mxu0 0.0
        %645 = vmatprep.subr.mxu0 0.0
        %646 = vmatpush1.msra.mxu0 0.0
        %647 = vmatprep.subr.mxu0 0.0
        %648 = vmatpush1.msra.mxu0 0.0
        %649 = vmatprep.subr.mxu0 0.0
        %650 = vmatpush1.msra.mxu0 0.0
        %651 = vmatprep.subr.mxu0 0.0
        %652 = vmatpush1.msra.mxu0 0.0
        %653 = vmatprep.subr.mxu0 0.0
        %654 = vmatpush1.msra.mxu0 0.0
        %655 = vmatprep.subr.mxu0 0.0
        %656 = vmatpush1.msra.mxu0 0.0
        %657 = vmatprep.subr.mxu0 0.0
        %658 = vmatpush1.msra.mxu0 0.0
        %659 = vmatprep.subr.mxu0 0.0
        %660 = vmatpush1.msra.mxu0 0.0
        %661 = vmatprep.subr.mxu0 0.0
        %662 = vmatpush1.msra.mxu0 0.0
        %663 = vmatprep.subr.mxu0 0.0
        %664 = vmatpush1.msra.mxu0 0.0
        %665 = vmatprep.subr.mxu0 0.0
        %666 = vmatpush1.msra.mxu0 0.0
        %667 = vmatprep.mubr.f32.mxu0 0.0
        %668 = vmatmul.mubr.f32.gmra.mrb[0].mxu0 %v530
        %v669 = vpop.f32.mrb[0].mxu0
        %v670 = vadd.f32 0.0, %v669
        %v671 = vpop.f32.mrb[0].mxu0
        %v672 = vadd.f32 0.0, %v671
        %673 = vdwg.mxu0
        %vm674 = vcmask 130048
        %v676 = vsel %vm674, %v310, 0
        %678 = vmatprep.subr.mxu0 %v312
        %679 = vmatpush1.msra.mxu0 %v311
        %680 = vmatprep.subr.mxu0 %v316
        %681 = vmatpush1.msra.mxu0 %v315
        %682 = vmatprep.subr.mxu0 %v320
        %683 = vmatpush1.msra.mxu0 %v319
        %684 = vmatprep.subr.mxu0 %v324
        %685 = vmatpush1.msra.mxu0 %v323
        %686 = vmatprep.subr.mxu0 %v328
        %687 = vmatpush1.msra.mxu0 %v327
        %688 = vmatprep.subr.mxu0 %v332
        %689 = vmatpush1.msra.mxu0 %v331
        %690 = vmatprep.subr.mxu0 %v336
        %691 = vmatpush1.msra.mxu0 %v335
        %692 = vmatprep.subr.mxu0 %v340
        %693 = vmatpush1.msra.mxu0 %v339
        %694 = vmatprep.subr.mxu0 %v344
        %695 = vmatpush1.msra.mxu0 %v343
        %696 = vmatprep.subr.mxu0 %v348
        %697 = vmatpush1.msra.mxu0 %v347
        %698 = vmatprep.subr.mxu0 %v352
        %699 = vmatpush1.msra.mxu0 %v351
        %700 = vmatprep.subr.mxu0 %v356
        %701 = vmatpush1.msra.mxu0 %v355
        %702 = vmatprep.subr.mxu0 %v360
        %703 = vmatpush1.msra.mxu0 %v359
        %704 = vmatprep.subr.mxu0 %v364
        %705 = vmatpush1.msra.mxu0 %v363
        %706 = vmatprep.subr.mxu0 %v368
        %707 = vmatpush1.msra.mxu0 %v367
        %708 = vmatprep.subr.mxu0 %v372
        %709 = vmatpush1.msra.mxu0 %v371
        %710 = vmatprep.subr.mxu0 %v376
        %711 = vmatpush1.msra.mxu0 %v375
        %712 = vmatprep.subr.mxu0 %v380
        %713 = vmatpush1.msra.mxu0 %v379
        %714 = vmatprep.subr.mxu0 %v384
        %715 = vmatpush1.msra.mxu0 %v383
        %716 = vmatprep.subr.mxu0 %v388
        %717 = vmatpush1.msra.mxu0 %v387
        %718 = vmatprep.subr.mxu0 %v392
        %719 = vmatpush1.msra.mxu0 %v391
        %720 = vmatprep.subr.mxu0 %v396
        %721 = vmatpush1.msra.mxu0 %v395
        %722 = vmatprep.subr.mxu0 %v400
        %723 = vmatpush1.msra.mxu0 %v399
        %724 = vmatprep.subr.mxu0 %v404
        %725 = vmatpush1.msra.mxu0 %v403
        %726 = vmatprep.subr.mxu0 %v408
        %727 = vmatpush1.msra.mxu0 %v407
        %728 = vmatprep.subr.mxu0 %v412
        %729 = vmatpush1.msra.mxu0 %v411
        %730 = vmatprep.subr.mxu0 %v416
        %731 = vmatpush1.msra.mxu0 %v415
        %732 = vmatprep.subr.mxu0 %v420
        %733 = vmatpush1.msra.mxu0 %v419
        %734 = vmatprep.subr.mxu0 %v424
        %735 = vmatpush1.msra.mxu0 %v423
        %736 = vmatprep.subr.mxu0 %v428
        %737 = vmatpush1.msra.mxu0 %v427
        %738 = vmatprep.subr.mxu0 %v432
        %739 = vmatpush1.msra.mxu0 %v431
        %740 = vmatprep.subr.mxu0 %v436
        %741 = vmatpush1.msra.mxu0 %v435
        %742 = vmatprep.mubr.f32.mxu0 %v308
        %743 = vmatmul.mubr.f32.gmra.mrb[0].mxu0 %v307
        %v744 = vpop.f32.mrb[0].mxu0
        %v745 = vadd.f32 %v599, %v744
        %v746 = vpop.f32.mrb[0].mxu0
        %v747 = vadd.f32 %v601, %v746
        %748 = vdwg.mxu0
        %749 = vmatprep.subr.mxu0 %v440
        %750 = vmatpush1.msra.mxu0 %v439
        %751 = vmatprep.subr.mxu0 %v444
        %752 = vmatpush1.msra.mxu0 %v443
        %753 = vmatprep.subr.mxu0 %v448
        %754 = vmatpush1.msra.mxu0 %v447
        %755 = vmatprep.subr.mxu0 %v452
        %756 = vmatpush1.msra.mxu0 %v451
        %757 = vmatprep.subr.mxu0 %v456
        %758 = vmatpush1.msra.mxu0 %v455
        %759 = vmatprep.subr.mxu0 %v460
        %760 = vmatpush1.msra.mxu0 %v459
        %761 = vmatprep.subr.mxu0 %v464
        %762 = vmatpush1.msra.mxu0 %v463
        %763 = vmatprep.subr.mxu0 %v468
        %764 = vmatpush1.msra.mxu0 %v467
        %765 = vmatprep.subr.mxu0 %v472
        %766 = vmatpush1.msra.mxu0 %v471
        %767 = vmatprep.subr.mxu0 %v476
        %768 = vmatpush1.msra.mxu0 %v475
        %769 = vmatprep.subr.mxu0 %v480
        %770 = vmatpush1.msra.mxu0 %v479
        %771 = vmatprep.subr.mxu0 %v484
        %772 = vmatpush1.msra.mxu0 %v483
        %773 = vmatprep.subr.mxu0 %v488
        %774 = vmatpush1.msra.mxu0 %v487
        %775 = vmatprep.subr.mxu0 %v492
        %776 = vmatpush1.msra.mxu0 %v491
        %777 = vmatprep.subr.mxu0 %v496
        %778 = vmatpush1.msra.mxu0 %v495
        %779 = vmatprep.subr.mxu0 %v500
        %780 = vmatpush1.msra.mxu0 %v499
        %781 = vmatprep.subr.mxu0 %v504
        %782 = vmatpush1.msra.mxu0 %v503
        %783 = vmatprep.subr.mxu0 %v508
        %784 = vmatpush1.msra.mxu0 %v507
        %785 = vmatprep.subr.mxu0 0.0
        %786 = vmatpush1.msra.mxu0 0.0
        %787 = vmatprep.subr.mxu0 0.0
        %788 = vmatpush1.msra.mxu0 0.0
        %789 = vmatprep.subr.mxu0 0.0
        %790 = vmatpush1.msra.mxu0 0.0
        %791 = vmatprep.subr.mxu0 0.0
        %792 = vmatpush1.msra.mxu0 0.0
        %793 = vmatprep.subr.mxu0 0.0
        %794 = vmatpush1.msra.mxu0 0.0
        %795 = vmatprep.subr.mxu0 0.0
        %796 = vmatpush1.msra.mxu0 0.0
        %797 = vmatprep.subr.mxu0 0.0
        %798 = vmatpush1.msra.mxu0 0.0
        %799 = vmatprep.subr.mxu0 0.0
        %800 = vmatpush1.msra.mxu0 0.0
        %801 = vmatprep.subr.mxu0 0.0
        %802 = vmatpush1.msra.mxu0 0.0
        %803 = vmatprep.subr.mxu0 0.0
        %804 = vmatpush1.msra.mxu0 0.0
        %805 = vmatprep.subr.mxu0 0.0
        %806 = vmatpush1.msra.mxu0 0.0
        %807 = vmatprep.subr.mxu0 0.0
        %808 = vmatpush1.msra.mxu0 0.0
        %809 = vmatprep.subr.mxu0 0.0
        %810 = vmatpush1.msra.mxu0 0.0
        %811 = vmatprep.subr.mxu0 0.0
        %812 = vmatpush1.msra.mxu0 0.0
        %813 = vmatprep.mubr.f32.mxu0 %v676
        %814 = vmatmul.mubr.f32.gmra.mrb[0].mxu0 %v309
        %v815 = vpop.f32.mrb[0].mxu0
        %v816 = vadd.f32 %v745, %v815
        %v817 = vpop.f32.mrb[0].mxu0
        %v818 = vadd.f32 %v747, %v817
        %819 = vdwg.mxu0
        %820 = vmatprep.subr.mxu0 %v314
        %821 = vmatpush1.msra.mxu0 %v313
        %822 = vmatprep.subr.mxu0 %v318
        %823 = vmatpush1.msra.mxu0 %v317
        %824 = vmatprep.subr.mxu0 %v322
        %825 = vmatpush1.msra.mxu0 %v321
        %826 = vmatprep.subr.mxu0 %v326
        %827 = vmatpush1.msra.mxu0 %v325
        %828 = vmatprep.subr.mxu0 %v330
        %829 = vmatpush1.msra.mxu0 %v329
        %830 = vmatprep.subr.mxu0 %v334
        %831 = vmatpush1.msra.mxu0 %v333
        %832 = vmatprep.subr.mxu0 %v338
        %833 = vmatpush1.msra.mxu0 %v337
        %834 = vmatprep.subr.mxu0 %v342
        %835 = vmatpush1.msra.mxu0 %v341
        %836 = vmatprep.subr.mxu0 %v346
        %837 = vmatpush1.msra.mxu0 %v345
        %838 = vmatprep.subr.mxu0 %v350
        %839 = vmatpush1.msra.mxu0 %v349
        %840 = vmatprep.subr.mxu0 %v354
        %841 = vmatpush1.msra.mxu0 %v353
        %842 = vmatprep.subr.mxu0 %v358
        %843 = vmatpush1.msra.mxu0 %v357
        %844 = vmatprep.subr.mxu0 %v362
        %845 = vmatpush1.msra.mxu0 %v361
        %846 = vmatprep.subr.mxu0 %v366
        %847 = vmatpush1.msra.mxu0 %v365
        %848 = vmatprep.subr.mxu0 %v370
        %849 = vmatpush1.msra.mxu0 %v369
        %850 = vmatprep.subr.mxu0 %v374
        %851 = vmatpush1.msra.mxu0 %v373
        %852 = vmatprep.subr.mxu0 %v378
        %853 = vmatpush1.msra.mxu0 %v377
        %854 = vmatprep.subr.mxu0 %v382
        %855 = vmatpush1.msra.mxu0 %v381
        %856 = vmatprep.subr.mxu0 %v386
        %857 = vmatpush1.msra.mxu0 %v385
        %858 = vmatprep.subr.mxu0 %v390
        %859 = vmatpush1.msra.mxu0 %v389
        %860 = vmatprep.subr.mxu0 %v394
        %861 = vmatpush1.msra.mxu0 %v393
        %862 = vmatprep.subr.mxu0 %v398
        %863 = vmatpush1.msra.mxu0 %v397
        %864 = vmatprep.subr.mxu0 %v402
        %865 = vmatpush1.msra.mxu0 %v401
        %866 = vmatprep.subr.mxu0 %v406
        %867 = vmatpush1.msra.mxu0 %v405
        %868 = vmatprep.subr.mxu0 %v410
        %869 = vmatpush1.msra.mxu0 %v409
        %870 = vmatprep.subr.mxu0 %v414
        %871 = vmatpush1.msra.mxu0 %v413
        %872 = vmatprep.subr.mxu0 %v418
        %873 = vmatpush1.msra.mxu0 %v417
        %874 = vmatprep.subr.mxu0 %v422
        %875 = vmatpush1.msra.mxu0 %v421
        %876 = vmatprep.subr.mxu0 %v426
        %877 = vmatpush1.msra.mxu0 %v425
        %878 = vmatprep.subr.mxu0 %v430
        %879 = vmatpush1.msra.mxu0 %v429
        %880 = vmatprep.subr.mxu0 %v434
        %881 = vmatpush1.msra.mxu0 %v433
        %882 = vmatprep.subr.mxu0 %v438
        %883 = vmatpush1.msra.mxu0 %v437
        %884 = vmatprep.mubr.f32.mxu0 %v308
        %885 = vmatmul.mubr.f32.gmra.mrb[0].mxu0 %v307
        %v886 = vpop.f32.mrb[0].mxu0
        %v887 = vadd.f32 %v670, %v886
        %v888 = vpop.f32.mrb[0].mxu0
        %v889 = vadd.f32 %v672, %v888
        %890 = vdwg.mxu0
        %891 = vmatprep.subr.mxu0 %v442
        %892 = vmatpush1.msra.mxu0 %v441
        %893 = vmatprep.subr.mxu0 %v446
        %894 = vmatpush1.msra.mxu0 %v445
        %895 = vmatprep.subr.mxu0 %v450
        %896 = vmatpush1.msra.mxu0 %v449
        %897 = vmatprep.subr.mxu0 %v454
        %898 = vmatpush1.msra.mxu0 %v453
        %899 = vmatprep.subr.mxu0 %v458
        %900 = vmatpush1.msra.mxu0 %v457
        %901 = vmatprep.subr.mxu0 %v462
        %902 = vmatpush1.msra.mxu0 %v461
        %903 = vmatprep.subr.mxu0 %v466
        %904 = vmatpush1.msra.mxu0 %v465
        %905 = vmatprep.subr.mxu0 %v470
        %906 = vmatpush1.msra.mxu0 %v469
        %907 = vmatprep.subr.mxu0 %v474
        %908 = vmatpush1.msra.mxu0 %v473
        %909 = vmatprep.subr.mxu0 %v478
        %910 = vmatpush1.msra.mxu0 %v477
        %911 = vmatprep.subr.mxu0 %v482
        %912 = vmatpush1.msra.mxu0 %v481
        %913 = vmatprep.subr.mxu0 %v486
        %914 = vmatpush1.msra.mxu0 %v485
        %915 = vmatprep.subr.mxu0 %v490
        %916 = vmatpush1.msra.mxu0 %v489
        %917 = vmatprep.subr.mxu0 %v494
        %918 = vmatpush1.msra.mxu0 %v493
        %919 = vmatprep.subr.mxu0 %v498
        %920 = vmatpush1.msra.mxu0 %v497
        %921 = vmatprep.subr.mxu0 %v502
        %922 = vmatpush1.msra.mxu0 %v501
        %923 = vmatprep.subr.mxu0 %v506
        %924 = vmatpush1.msra.mxu0 %v505
        %925 = vmatprep.subr.mxu0 %v510
        %926 = vmatpush1.msra.mxu0 %v509
        %927 = vmatprep.subr.mxu0 0.0
        %928 = vmatpush1.msra.mxu0 0.0
        %929 = vmatprep.subr.mxu0 0.0
        %930 = vmatpush1.msra.mxu0 0.0
        %931 = vmatprep.subr.mxu0 0.0
        %932 = vmatpush1.msra.mxu0 0.0
        %933 = vmatprep.subr.mxu0 0.0
        %934 = vmatpush1.msra.mxu0 0.0
        %935 = vmatprep.subr.mxu0 0.0
        %936 = vmatpush1.msra.mxu0 0.0
        %937 = vmatprep.subr.mxu0 0.0
        %938 = vmatpush1.msra.mxu0 0.0
        %939 = vmatprep.subr.mxu0 0.0
        %940 = vmatpush1.msra.mxu0 0.0
        %941 = vmatprep.subr.mxu0 0.0
        %942 = vmatpush1.msra.mxu0 0.0
        %943 = vmatprep.subr.mxu0 0.0
        %944 = vmatpush1.msra.mxu0 0.0
        %945 = vmatprep.subr.mxu0 0.0
        %946 = vmatpush1.msra.mxu0 0.0
        %947 = vmatprep.subr.mxu0 0.0
        %948 = vmatpush1.msra.mxu0 0.0
        %949 = vmatprep.subr.mxu0 0.0
        %950 = vmatpush1.msra.mxu0 0.0
        %951 = vmatprep.subr.mxu0 0.0
        %952 = vmatpush1.msra.mxu0 0.0
        %953 = vmatprep.subr.mxu0 0.0
        %954 = vmatpush1.msra.mxu0 0.0
        %955 = vmatprep.mubr.f32.mxu0 %v676
        %956 = vmatmul.mubr.f32.gmra.mrb[0].mxu0 %v309
        %v957 = vpop.f32.mrb[0].mxu0
        %v958 = vadd.f32 %v887, %v957
        %v959 = vpop.f32.mrb[0].mxu0
        %v960 = vadd.f32 %v889, %v959
        %961 = vdwg.mxu0
        %v962 = vld [vmem:[%s4] sm:$0xf]
        %v964 = vlaneseq
        %v965 = vshrl.u32 %v964, 7
        %v966 = vsub.s32 0, %v965
        %v967 = vrot.slane %v962, %v966
        %v968 = vlaneseq
        %v969 = vshrl.u32 %v968, 7
        %v970 = vsub.s32 1, %v969
        %v971 = vrot.slane %v962, %v970
        %v972 = vlaneseq
        %v973 = vshrl.u32 %v972, 7
        %v974 = vsub.s32 2, %v973
        %v975 = vrot.slane %v962, %v974
        %v976 = vlaneseq
        %v977 = vshrl.u32 %v976, 7
        %v978 = vsub.s32 3, %v977
        %v979 = vrot.slane %v962, %v978
        %v984 = vadd.f32 %v816, %v967
        %v985 = vadd.f32 %v818, %v971
        %v986 = vadd.f32 %v958, %v975
        %v987 = vadd.f32 %v960, %v979
        %988 = vst [vmem:[%s306] sm:$0xff] %v984
        %989 = vst [vmem:[%s306 + $0x8] sm:$0xff] %v985
        %990 = vst [vmem:[%s306 + $0x10] sm:$0xff] %v986
        %991 = vst.msk [vmem:[%s306 + $0x18] sm:$0xff] %vm674, %v987
        %s992 = sand.u32 %s149, 1
        %s993 = scalar_lea.sflag [#allocation4], %s992
        %s994 = sand.u32 %s149, 1
        %s995 = smul.addr %s994, 32
        %s996 = scalar_lea.vmem [#allocation10], %s995
        // Predicated region
        $region57: #{tpu_custom_call.1} parent=39 // pred_check
          %p997 = pneg %p159
        $region58: #{tpu_custom_call.1} parent=39 // pred_check_branch
          %999 = sbr.rel (%p997) target = $region60
        $region59: #{tpu_custom_call.1} parent=39 // pred_region
          %s1001 = ssub.s32 512, 512
          %1002 = vsyncadd %s993, %s1001
          %s1003 = smul.addr %s26, 4
          %s1004 = smul.addr %s1003, 128
          %s1005 = scalar_lea.hbm %s5, %s1004
          %s1007 = sshll.u32 %s996, 4
          %s1008 = int_to_ptr.vmem [resolvable:$true] %s1007
          %1010 = dma.vmem_to_hbm [thread:$0]  %s1008, 512, %s1005, %s993
        $region60: #{tpu_custom_call.1} parent=39 // pred_fallthru
          _
      $region40: #{tpu_custom_call.1} parent=5 // pred_fallthru
        _
      %p1011 = scmp.le.s32.totalorder 2, %s21
      // Predicated region
      $region61: #{tpu_custom_call.1} parent=5 // pred_check
        %p1012 = pneg %p1011
      $region62: #{tpu_custom_call.1} parent=5 // pred_check_branch
        %1014 = sbr.rel (%p1012) target = $region64
      $region63: #{tpu_custom_call.1} parent=5 // pred_region
        %s1015 = ssub.s32 %s21, 2
        // Predicated region
        $region65: #{tpu_custom_call.1} parent=63 // pred_check
          %p1016 = pneg %p165
        $region66: #{tpu_custom_call.1} parent=63 // pred_check_branch
          %1018 = sbr.rel (%p1016) target = $region68
        $region67: #{tpu_custom_call.1} parent=63 // pred_region
          %s1019 = sand.u32 %s150, 1
          %s1020 = scalar_lea.sflag [#allocation4], %s1019
          %s1021 = sand.u32 %s150, 1
          %s1022 = smul.addr %s1021, 32
          %s1023 = scalar_lea.vmem [#allocation10], %s1022
          %1024 = dma.done %s1020, 512
        $region68: #{tpu_custom_call.1} parent=63 // pred_fallthru
          _
      $region64: #{tpu_custom_call.1} parent=5 // pred_fallthru
        _
    $region6: #{tpu_custom_call.1} parent=1 // loop_footer
      %s25 = sadd.s32 1, %s21
    $region7: #{tpu_custom_call.1} parent=1 // loop_footer_branch
      %20 = sbr.rel target = $region3
    $region8: #{tpu_custom_call.1} parent=1 // loop_exit
      _
    %1025 = vsyncpa [#allocation3], 1
    %s1026 = scalar_lea.sflag [#allocation3], 1
    %1027 = vsyncpa %s1026, 1
    %1028 = vsyncpa [#allocation6], 1
    %s1029 = scalar_lea.sflag [#allocation6], 1
    %1030 = vsyncpa %s1029, 1
    %1031 = vsyncpa [#allocation9], 1
    %1032 = vsyncpa [#allocation4], 1
    %s1033 = scalar_lea.sflag [#allocation4], 1
    %1034 = vsyncpa %s1033, 1

</llo_original>
